<compile_context>
chip_gen: v5e
topology: v5e:2x2
jax: 0.10.0
libtpu: 0.0.40
codegen_flags: <defaults>
</compile_context>

<pallas_src>
import functools

import jax
import jax.numpy as jnp
from jax.experimental import pallas as pl
from jax.experimental.pallas import tpu as pltpu


# ---------------------------------------------------------------------------
# Fused kernel
# ---------------------------------------------------------------------------
def _make_fused_decoder_kernel(n_blocks, has_skip, nonlinears, eps):
    """Fused multi-block deconv + train-mode BatchNorm + activation kernel.

    Input refs (all full-array VMEM blocks), in order:
      x_slab                       (C0, M)
      then per block k:
        [skip_slab_k]              (P_k*Cs_k, M)        only if has_skip[k]
        wx_k                       (rows_k, P_k*C_k)    block-diag expanded deconv weight
        [ws_k]                     (rows_k, P_k*Cs_k)   skip-channel part, if any
        gt_k                       (rows_k, Cout_k)     one-hot row -> channel matrix
        gamma_k, beta_k            (1, Cout_k)          BN affine parameters
    Output ref: final activation slab (rows_{n-1}, M).
    """

    def kernel(*refs):
        in_refs = refs[:-1]
        o_ref = refs[-1]

        idx = 0
        a = in_refs[idx][...]          # activation slab, lane-dense (rows, M)
        idx += 1

        for k in range(n_blocks):
            if has_skip[k]:
                skip = in_refs[idx][...]
                idx += 1
            wx = in_refs[idx][...]
            idx += 1
            if has_skip[k]:
                ws = in_refs[idx][...]
                idx += 1
            gt = in_refs[idx][...]      # (rows, C) one-hot
            idx += 1
            gamma = in_refs[idx][...]   # (1, C)
            idx += 1
            beta = in_refs[idx][...]    # (1, C)
            idx += 1

            # Transposed conv (stride == kernel) as lane-dense MXU matmul(s); no bias
            # (exactly cancelled by the train-mode BatchNorm mean subtraction below).
            z = jnp.dot(wx, a, preferred_element_type=jnp.float32)
            if has_skip[k]:
                z = z + jnp.dot(ws, skip, preferred_element_type=jnp.float32)

            rows, m = z.shape
            n_ch = gt.shape[1]
            inv_cnt = 1.0 / float((rows // n_ch) * m)

            # Vectorized train-mode BatchNorm, single pass over z (E[z], E[z^2]).
            s1 = jnp.sum(z, axis=1, keepdims=True)            # (rows, 1)  lane reduce
            s2 = jnp.sum(z * z, axis=1, keepdims=True)        # (rows, 1)
            cs1 = jnp.sum(s1 * gt, axis=0, keepdims=True)     # (1, C)     group reduce
            cs2 = jnp.sum(s2 * gt, axis=0, keepdims=True)     # (1, C)
            mean = cs1 * inv_cnt
            var = cs2 * inv_cnt - mean * mean
            scale_c = gamma * jax.lax.rsqrt(var + eps)        # (1, C)
            shift_c = beta - mean * scale_c                   # (1, C)
            scale_r = jnp.sum(gt * scale_c, axis=1, keepdims=True)   # (rows, 1)
            shift_r = jnp.sum(gt * shift_c, axis=1, keepdims=True)   # (rows, 1)

            v = z * scale_r + shift_r
            nl = nonlinears[k]
            if nl == "relu":
                v = jnp.maximum(v, 0.0)
            elif nl == "sigmoid":
                v = jax.nn.sigmoid(v)
            else:
                raise NotImplementedError(nl)
            a = v

        o_ref[...] = a   # one unmasked, full-width (lane-dense) store

    return kernel


# ---------------------------------------------------------------------------
# Host-side layout helpers (tiny XLA ops; all data stays lane-dense in between)
# ---------------------------------------------------------------------------
def _x_to_slab(x):
    n, c, h, w = x.shape
    return jnp.transpose(x, (1, 0, 2, 3)).reshape(c, n * h * w)


def _skip_to_slab(skip, kernel_sizes_before, n, h0, w0):
    """(N, Cs, H0*prod Kh, W0*prod Kw) -> (P*Cs, N*H0*W0), rows ordered (kk_0..kk_{k-1}, cs)."""
    k = len(kernel_sizes_before)
    cs = skip.shape[1]
    khs = [ks[0] for ks in kernel_sizes_before]
    kws = [ks[1] for ks in kernel_sizes_before]
    t = skip.reshape((n, cs, h0, *khs, w0, *kws))
    h_axes = list(range(2, 3 + k))            # [h0, kh_0 .. kh_{k-1}]
    w_axes = list(range(3 + k, 4 + 2 * k))    # [w0, kw_0 .. kw_{k-1}]
    perm = []
    for j in range(k):
        perm += [h_axes[1 + j], w_axes[1 + j]]
    perm += [1, 0, h_axes[0], w_axes[0]]
    p = 1
    for kh, kw in kernel_sizes_before:
        p *= kh * kw
    return jnp.transpose(t, perm).reshape(p * cs, n * h0 * w0)


def _slab_to_nchw(slab, kernel_sizes, c, n, h0, w0):
    """(P*C, N*H0*W0) rows (kk_0..kk_{nb-1}, c) -> (N, C, H0*prod Kh, W0*prod Kw)."""
    nb = len(kernel_sizes)
    khs = [ks[0] for ks in kernel_sizes]
    kws = [ks[1] for ks in kernel_sizes]
    shape = []
    for j in range(nb):
        shape += [khs[j], kws[j]]
    shape += [c, n, h0, w0]
    t = slab.reshape(shape)
    perm = ([2 * nb + 1, 2 * nb, 2 * nb + 2] + [2 * j for j in range(nb)]
            + [2 * nb + 3] + [2 * j + 1 for j in range(nb)])
    hf, wf = h0, w0
    for kh, kw in kernel_sizes:
        hf *= kh
        wf *= kw
    return jnp.transpose(t, perm).reshape(n, c, hf, wf)


def _expand_weight(weight, p, c_main):
    """ConvTranspose2d weight (Cin, Cout, Kh, Kw) -> block-diagonal expanded matmul weights.

    Returns (wx, ws): wx (P*KK*Cout, P*c_main) and ws (P*KK*Cout, P*(Cin-c_main)) or None.
    Row order (p, kh, kw, cout) matches the activation-slab row convention, so block k's
    deconv on the *unshuffled* slab is a single matmul (no pixel shuffle needed).
    """
    cin, cout, kh, kw = weight.shape
    w_small = jnp.transpose(weight, (2, 3, 1, 0)).reshape(kh * kw * cout, cin)
    eye = jnp.eye(p, dtype=weight.dtype)
    wx = jnp.kron(eye, w_small[:, :c_main])
    ws = jnp.kron(eye, w_small[:, c_main:]) if cin > c_main else None
    return wx, ws


# ---------------------------------------------------------------------------
# Decoder2d forward (single pallas_call)
# ---------------------------------------------------------------------------
def decoder2d_forward(x, skips, params_list, *, kernel_size, nonlinear="relu", eps=1e-5):
    """Decoder2d.forward (stride == kernel_size path) fused into one pallas_call."""
    n, c0, h0, w0 = x.shape
    n_blocks = len(params_list)
    if isinstance(kernel_size, list):
        kernel_sizes = [tuple(ks) for ks in kernel_size]
    else:
        kernel_sizes = [tuple(kernel_size)] * n_blocks
    nonlinears = list(nonlinear) if isinstance(nonlinear, list) else [nonlinear] * n_blocks

    m0 = n * h0 * w0   # lane dimension; a multiple of 128 keeps every load/store full-width

    args = [_x_to_slab(x.astype(jnp.float32))]
    has_skip = []
    p = 1              # pixel-expansion factor prod_{j<k} Kh_j*Kw_j
    c_prev = c0        # channels carried by the activation slab
    for k in range(n_blocks):
        weight, _bias, gamma, beta = params_list[k]   # _bias is cancelled by train-mode BN
        cin, cout, kh, kw = weight.shape
        assert (kh, kw) == kernel_sizes[k]
        skip = None if k == 0 else (skips[k] if skips is not None and k < len(skips) else None)
        has_skip.append(skip is not None)
        c_skip = 0 if skip is None else skip.shape[1]
        assert c_prev + c_skip == cin

        if skip is not None:
            args.append(_skip_to_slab(skip.astype(jnp.float32), kernel_sizes[:k], n, h0, w0))
        wx, ws = _expand_weight(weight.astype(jnp.float32), p, c_prev)
        rows = p * kh * kw * cout
        gt = (jnp.arange(rows)[:, None] % cout
              == jnp.arange(cout)[None, :]).astype(jnp.float32)
        args.append(wx)
        if skip is not None:
            args.append(ws)
        args += [gt,
                 gamma.astype(jnp.float32).reshape(1, cout),
                 beta.astype(jnp.float32).reshape(1, cout)]

        p *= kh * kw
        c_prev = cout

    kernel = _make_fused_decoder_kernel(n_blocks, tuple(has_skip), tuple(nonlinears), eps)
    vmem = pltpu.MemorySpace.VMEM
    out_slab = pl.pallas_call(
        kernel,
        out_shape=jax.ShapeDtypeStruct((p * c_prev, m0), jnp.float32),
        in_specs=[pl.BlockSpec(memory_space=vmem)] * len(args),
        out_specs=pl.BlockSpec(memory_space=vmem),
    )(*args)
    return _slab_to_nchw(out_slab, kernel_sizes, c_prev, n, h0, w0)


# ---------------------------------------------------------------------------
# Parameter init + pure-JAX reference
# ---------------------------------------------------------------------------
def init_decoder2d_params(key, channels, kernel_size):
    n_blocks = len(channels) - 1
    kh, kw = kernel_size
    params = []
    for nb in range(n_blocks):
        cin, cout = channels[nb], channels[nb + 1] // 2
        key, k1, k2, k3, k4 = jax.random.split(key, 5)
        wgt = 0.1 * jax.random.normal(k1, (cin, cout, kh, kw), jnp.float32)
        b = 0.1 * jax.random.normal(k2, (cout,), jnp.float32)
        gamma = 1.0 + 0.1 * jax.random.normal(k3, (cout,), jnp.float32)
        beta = 0.1 * jax.random.normal(k4, (cout,), jnp.float32)
        params.append((wgt, b, gamma, beta))
    return params


def _ref_block(x, params, kernel_size, nonlinear, skip=None, eps=1e-5):
    """Pure-JAX reference of DecoderBlock2d (stride==kernel path, train-mode BN)."""
    wgt, b, gamma, beta = params
    if skip is not None:
        x = jnp.concatenate([x, skip], axis=1)
    nN, _, _, _ = x.shape
    kh, kw = kernel_size
    cout = wgt.shape[1]
    y = jnp.einsum("nchw,codq->nohdwq", x, wgt)          # (N, Cout, H, Kh, W, Kw)
    y = y.reshape(nN, cout, y.shape[2] * kh, y.shape[4] * kw) + b[None, :, None, None]
    mean = y.mean(axis=(0, 2, 3), keepdims=True)
    var = ((y - mean) ** 2).mean(axis=(0, 2, 3), keepdims=True)
    yn = (y - mean) / jnp.sqrt(var + eps) * gamma[None, :, None, None] \
         + beta[None, :, None, None]
    return jnp.maximum(yn, 0.0) if nonlinear == "relu" else jax.nn.sigmoid(yn)


if __name__ == "__main__":
    channels = [4, 8, 8]
    kernel_size = (2, 2)
    N, H, W = 2, 16, 16

    key = jax.random.PRNGKey(0)
    key, kx, ks, kp = jax.random.split(key, 4)
    x = jax.random.normal(kx, (N, channels[0], H, W), jnp.float32)
    # skip[1]: concatenated with block-0 output (channels[1]//2 channels at 32x32).
    skip1 = jax.random.normal(
        ks, (N, channels[1] - channels[1] // 2,
             H * kernel_size[0], W * kernel_size[1]), jnp.float32)
    skips = [None, skip1]
    params = init_decoder2d_params(kp, channels, kernel_size)

    fwd = jax.jit(functools.partial(decoder2d_forward, kernel_size=kernel_size,
                                    nonlinear="relu"))
    out = jax.block_until_ready(fwd(x, skips, params))

    # Self-check against a pure-JAX reference.
    ref = x
    for nb, prm in enumerate(params):
        ref = _ref_block(ref, prm, kernel_size, "relu",
                         skip=None if nb == 0 else skips[nb])

    assert out.shape == (N, channels[-1] // 2,
                         H * kernel_size[0] ** 2, W * kernel_size[1] ** 2), out.shape
    err = float(jnp.max(jnp.abs(out - ref)))
    assert jnp.allclose(out, ref, atol=1e-3, rtol=1e-3), err
    print("KERNEL_OK")
</pallas_src>

<mosaic_0001>
module attributes {stable_mosaic.version = 11 : i64} {
  func.func @kernel(%arg0: memref<4x512xf32, #tpu.memory_space<vmem>>, %arg1: memref<16x4xf32, #tpu.memory_space<vmem>>, %arg2: memref<16x4xf32, #tpu.memory_space<vmem>>, %arg3: memref<1x4xf32, #tpu.memory_space<vmem>>, %arg4: memref<1x4xf32, #tpu.memory_space<vmem>>, %arg5: memref<16x512xf32, #tpu.memory_space<vmem>>, %arg6: memref<64x16xf32, #tpu.memory_space<vmem>>, %arg7: memref<64x16xf32, #tpu.memory_space<vmem>>, %arg8: memref<64x4xf32, #tpu.memory_space<vmem>>, %arg9: memref<1x4xf32, #tpu.memory_space<vmem>>, %arg10: memref<1x4xf32, #tpu.memory_space<vmem>>, %arg11: memref<64x512xf32, #tpu.memory_space<vmem>>) attributes {dimension_semantics = [], scalar_prefetch = 0 : i64, scratch_operands = 0 : i64, tpu.core_type = #tpu.core_type<tc>} {
    %c0 = arith.constant 0 : index
    %c0_0 = arith.constant 0 : index
    %0 = vector.load %arg0[%c0, %c0_0] : memref<4x512xf32, #tpu.memory_space<vmem>>, vector<4x512xf32>
    %c0_1 = arith.constant 0 : index
    %c0_2 = arith.constant 0 : index
    %1 = vector.load %arg1[%c0_1, %c0_2] : memref<16x4xf32, #tpu.memory_space<vmem>>, vector<16x4xf32>
    %c0_3 = arith.constant 0 : index
    %c0_4 = arith.constant 0 : index
    %2 = vector.load %arg2[%c0_3, %c0_4] : memref<16x4xf32, #tpu.memory_space<vmem>>, vector<16x4xf32>
    %c0_5 = arith.constant 0 : index
    %c0_6 = arith.constant 0 : index
    %3 = vector.load %arg3[%c0_5, %c0_6] : memref<1x4xf32, #tpu.memory_space<vmem>>, vector<1x4xf32>
    %c0_7 = arith.constant 0 : index
    %c0_8 = arith.constant 0 : index
    %4 = vector.load %arg4[%c0_7, %c0_8] : memref<1x4xf32, #tpu.memory_space<vmem>>, vector<1x4xf32>
    %cst = arith.constant dense<0.000000e+00> : vector<16x512xf32>
    %5 = tpu.matmul %1, %0, %cst {dimension_numbers = #tpu.dot_dimension_numbers<[1], [0], [0], [1], [0, 0, 1, 1], [], []>} : vector<16x4xf32>, vector<4x512xf32>, vector<16x512xf32> -> vector<16x512xf32>
    %cst_9 = arith.constant dense<0.000000e+00> : vector<16xf32>
    %6 = vector.multi_reduction <add>, %5, %cst_9 [1] : vector<16x512xf32> to vector<16xf32>
    %7 = vector.shape_cast %6 : vector<16xf32> to vector<16x1xf32>
    %8 = arith.mulf %5, %5 : vector<16x512xf32>
    %cst_10 = arith.constant dense<0.000000e+00> : vector<16xf32>
    %9 = vector.multi_reduction <add>, %8, %cst_10 [1] : vector<16x512xf32> to vector<16xf32>
    %10 = vector.shape_cast %9 : vector<16xf32> to vector<16x1xf32>
    %11 = vector.broadcast %7 : vector<16x1xf32> to vector<16x4xf32>
    %12 = arith.mulf %11, %2 : vector<16x4xf32>
    %cst_11 = arith.constant dense<0.000000e+00> : vector<4xf32>
    %13 = vector.multi_reduction <add>, %12, %cst_11 [0] : vector<16x4xf32> to vector<4xf32>
    %14 = vector.shape_cast %13 : vector<4xf32> to vector<1x4xf32>
    %15 = vector.broadcast %10 : vector<16x1xf32> to vector<16x4xf32>
    %16 = arith.mulf %15, %2 : vector<16x4xf32>
    %cst_12 = arith.constant dense<0.000000e+00> : vector<4xf32>
    %17 = vector.multi_reduction <add>, %16, %cst_12 [0] : vector<16x4xf32> to vector<4xf32>
    %18 = vector.shape_cast %17 : vector<4xf32> to vector<1x4xf32>
    %cst_13 = arith.constant 4.8828125E-4 : f32
    %19 = vector.broadcast %cst_13 : f32 to vector<1x4xf32>
    %20 = arith.mulf %14, %19 : vector<1x4xf32>
    %cst_14 = arith.constant 4.8828125E-4 : f32
    %21 = vector.broadcast %cst_14 : f32 to vector<1x4xf32>
    %22 = arith.mulf %18, %21 : vector<1x4xf32>
    %23 = arith.mulf %20, %20 : vector<1x4xf32>
    %24 = arith.subf %22, %23 : vector<1x4xf32>
    %cst_15 = arith.constant 9.99999974E-6 : f32
    %25 = vector.broadcast %cst_15 : f32 to vector<1x4xf32>
    %26 = arith.addf %24, %25 : vector<1x4xf32>
    %27 = math.rsqrt %26 : vector<1x4xf32>
    %28 = arith.mulf %3, %27 : vector<1x4xf32>
    %29 = arith.mulf %20, %28 : vector<1x4xf32>
    %30 = arith.subf %4, %29 : vector<1x4xf32>
    %31 = vector.broadcast %28 : vector<1x4xf32> to vector<16x4xf32>
    %32 = arith.mulf %2, %31 : vector<16x4xf32>
    %cst_16 = arith.constant dense<0.000000e+00> : vector<16xf32>
    %33 = vector.multi_reduction <add>, %32, %cst_16 [1] : vector<16x4xf32> to vector<16xf32>
    %34 = vector.shape_cast %33 : vector<16xf32> to vector<16x1xf32>
    %35 = vector.broadcast %30 : vector<1x4xf32> to vector<16x4xf32>
    %36 = arith.mulf %2, %35 : vector<16x4xf32>
    %cst_17 = arith.constant dense<0.000000e+00> : vector<16xf32>
    %37 = vector.multi_reduction <add>, %36, %cst_17 [1] : vector<16x4xf32> to vector<16xf32>
    %38 = vector.shape_cast %37 : vector<16xf32> to vector<16x1xf32>
    %39 = vector.broadcast %34 : vector<16x1xf32> to vector<16x512xf32>
    %40 = arith.mulf %5, %39 : vector<16x512xf32>
    %41 = vector.broadcast %38 : vector<16x1xf32> to vector<16x512xf32>
    %42 = arith.addf %40, %41 : vector<16x512xf32>
    %cst_18 = arith.constant 0.000000e+00 : f32
    %43 = vector.broadcast %cst_18 : f32 to vector<16x512xf32>
    %44 = arith.maximumf %42, %43 : vector<16x512xf32>
    %c0_19 = arith.constant 0 : index
    %c0_20 = arith.constant 0 : index
    %45 = vector.load %arg5[%c0_19, %c0_20] : memref<16x512xf32, #tpu.memory_space<vmem>>, vector<16x512xf32>
    %c0_21 = arith.constant 0 : index
    %c0_22 = arith.constant 0 : index
    %46 = vector.load %arg6[%c0_21, %c0_22] : memref<64x16xf32, #tpu.memory_space<vmem>>, vector<64x16xf32>
    %c0_23 = arith.constant 0 : index
    %c0_24 = arith.constant 0 : index
    %47 = vector.load %arg7[%c0_23, %c0_24] : memref<64x16xf32, #tpu.memory_space<vmem>>, vector<64x16xf32>
    %c0_25 = arith.constant 0 : index
    %c0_26 = arith.constant 0 : index
    %48 = vector.load %arg8[%c0_25, %c0_26] : memref<64x4xf32, #tpu.memory_space<vmem>>, vector<64x4xf32>
    %c0_27 = arith.constant 0 : index
    %c0_28 = arith.constant 0 : index
    %49 = vector.load %arg9[%c0_27, %c0_28] : memref<1x4xf32, #tpu.memory_space<vmem>>, vector<1x4xf32>
    %c0_29 = arith.constant 0 : index
    %c0_30 = arith.constant 0 : index
    %50 = vector.load %arg10[%c0_29, %c0_30] : memref<1x4xf32, #tpu.memory_space<vmem>>, vector<1x4xf32>
    %cst_31 = arith.constant dense<0.000000e+00> : vector<64x512xf32>
    %51 = tpu.matmul %46, %44, %cst_31 {dimension_numbers = #tpu.dot_dimension_numbers<[1], [0], [0], [1], [0, 0, 1, 1], [], []>} : vector<64x16xf32>, vector<16x512xf32>, vector<64x512xf32> -> vector<64x512xf32>
    %cst_32 = arith.constant dense<0.000000e+00> : vector<64x512xf32>
    %52 = tpu.matmul %47, %45, %cst_32 {dimension_numbers = #tpu.dot_dimension_numbers<[1], [0], [0], [1], [0, 0, 1, 1], [], []>} : vector<64x16xf32>, vector<16x512xf32>, vector<64x512xf32> -> vector<64x512xf32>
    %53 = arith.addf %51, %52 : vector<64x512xf32>
    %cst_33 = arith.constant dense<0.000000e+00> : vector<64xf32>
    %54 = vector.multi_reduction <add>, %53, %cst_33 [1] : vector<64x512xf32> to vector<64xf32>
    %55 = vector.shape_cast %54 : vector<64xf32> to vector<64x1xf32>
    %56 = arith.mulf %53, %53 : vector<64x512xf32>
    %cst_34 = arith.constant dense<0.000000e+00> : vector<64xf32>
    %57 = vector.multi_reduction <add>, %56, %cst_34 [1] : vector<64x512xf32> to vector<64xf32>
    %58 = vector.shape_cast %57 : vector<64xf32> to vector<64x1xf32>
    %59 = vector.broadcast %55 : vector<64x1xf32> to vector<64x4xf32>
    %60 = arith.mulf %59, %48 : vector<64x4xf32>
    %cst_35 = arith.constant dense<0.000000e+00> : vector<4xf32>
    %61 = vector.multi_reduction <add>, %60, %cst_35 [0] : vector<64x4xf32> to vector<4xf32>
    %62 = vector.shape_cast %61 : vector<4xf32> to vector<1x4xf32>
    %63 = vector.broadcast %58 : vector<64x1xf32> to vector<64x4xf32>
    %64 = arith.mulf %63, %48 : vector<64x4xf32>
    %cst_36 = arith.constant dense<0.000000e+00> : vector<4xf32>
    %65 = vector.multi_reduction <add>, %64, %cst_36 [0] : vector<64x4xf32> to vector<4xf32>
    %66 = vector.shape_cast %65 : vector<4xf32> to vector<1x4xf32>
    %cst_37 = arith.constant 1.22070313E-4 : f32
    %67 = vector.broadcast %cst_37 : f32 to vector<1x4xf32>
    %68 = arith.mulf %62, %67 : vector<1x4xf32>
    %cst_38 = arith.constant 1.22070313E-4 : f32
    %69 = vector.broadcast %cst_38 : f32 to vector<1x4xf32>
    %70 = arith.mulf %66, %69 : vector<1x4xf32>
    %71 = arith.mulf %68, %68 : vector<1x4xf32>
    %72 = arith.subf %70, %71 : vector<1x4xf32>
    %cst_39 = arith.constant 9.99999974E-6 : f32
    %73 = vector.broadcast %cst_39 : f32 to vector<1x4xf32>
    %74 = arith.addf %72, %73 : vector<1x4xf32>
    %75 = math.rsqrt %74 : vector<1x4xf32>
    %76 = arith.mulf %49, %75 : vector<1x4xf32>
    %77 = arith.mulf %68, %76 : vector<1x4xf32>
    %78 = arith.subf %50, %77 : vector<1x4xf32>
    %79 = vector.broadcast %76 : vector<1x4xf32> to vector<64x4xf32>
    %80 = arith.mulf %48, %79 : vector<64x4xf32>
    %cst_40 = arith.constant dense<0.000000e+00> : vector<64xf32>
    %81 = vector.multi_reduction <add>, %80, %cst_40 [1] : vector<64x4xf32> to vector<64xf32>
    %82 = vector.shape_cast %81 : vector<64xf32> to vector<64x1xf32>
    %83 = vector.broadcast %78 : vector<1x4xf32> to vector<64x4xf32>
    %84 = arith.mulf %48, %83 : vector<64x4xf32>
    %cst_41 = arith.constant dense<0.000000e+00> : vector<64xf32>
    %85 = vector.multi_reduction <add>, %84, %cst_41 [1] : vector<64x4xf32> to vector<64xf32>
    %86 = vector.shape_cast %85 : vector<64xf32> to vector<64x1xf32>
    %87 = vector.broadcast %82 : vector<64x1xf32> to vector<64x512xf32>
    %88 = arith.mulf %53, %87 : vector<64x512xf32>
    %89 = vector.broadcast %86 : vector<64x1xf32> to vector<64x512xf32>
    %90 = arith.addf %88, %89 : vector<64x512xf32>
    %cst_42 = arith.constant 0.000000e+00 : f32
    %91 = vector.broadcast %cst_42 : f32 to vector<64x512xf32>
    %92 = arith.maximumf %90, %91 : vector<64x512xf32>
    %c0_43 = arith.constant 0 : index
    %c0_44 = arith.constant 0 : index
    %93 = vector.load %arg11[%c0_43, %c0_44] : memref<64x512xf32, #tpu.memory_space<vmem>>, vector<64x512xf32>
    tpu.vector_store %arg11[%c0_43, %c0_44], %92 {strides = array<i32>} : memref<64x512xf32, #tpu.memory_space<vmem>>, vector<64x512xf32>,
    return
  }
}

</mosaic_0001>

<llo_original>
// kernel: decoder2d_forward.1
$region0: #{decoder2d_forward.1}
  #allocation0 [shape = 'u32[]', space=smem, size = 0x4, offset = 0x4, fixed_abs, tag = 'smem constant byte address 0x4 - core index']
  #allocation1 [shape = 'u32[72,128]{1,0:T(1,128)}', space=vmem, size = 0x9000, scoped, tag = 'internal scratch']
  %s0 = inlined_call_operand.vmem [shape: f32[4,512], index: 0, kind: input, shape index: {}]
  %s1 = inlined_call_operand.vmem [shape: f32[16,4], index: 1, kind: input, shape index: {}]
  %s2 = inlined_call_operand.vmem [shape: f32[16,4], index: 2, kind: input, shape index: {}]
  %s3 = inlined_call_operand.hbm [shape: f32[1,4], index: 3, kind: input, shape index: {}]
  %s4 = inlined_call_operand.hbm [shape: f32[1,4], index: 4, kind: input, shape index: {}]
  %s5 = inlined_call_operand.vmem [shape: f32[16,512], index: 5, kind: input, shape index: {}]
  %s6 = inlined_call_operand.vmem [shape: f32[64,16], index: 6, kind: input, shape index: {}]
  %s7 = inlined_call_operand.vmem [shape: f32[64,16], index: 7, kind: input, shape index: {}]
  %s8 = inlined_call_operand.vmem [shape: f32[64,4], index: 8, kind: input, shape index: {}]
  %s9 = inlined_call_operand.hbm [shape: f32[1,4], index: 9, kind: input, shape index: {}]
  %s10 = inlined_call_operand.hbm [shape: f32[1,4], index: 10, kind: input, shape index: {}]
  %s11 = inlined_call_operand.vmem [shape: f32[64,512], index: 11, kind: output, shape index: {}]
  %s12 = sld [smem:[#allocation0]]
  $region70: #{decoder2d_forward.1} parent=0
    _
  %s14 = ssub.s32 1, %s12
  %s15 = scalar_select 0, %s14, %s12
  $region1: #{decoder2d_forward.1} parent=0
    #allocation2 [shape = 'u8[512]{0}', space=vmem, size = 0x400, scoped, tag = 'input window, operand 3, single buffered']
    #allocation3 [shape = 's32[1]{0}', space=sflag, size = 0x4, scoped, tag = 'scoped memory for decoder2d_forward.1']
    #allocation4 [shape = 'u8[512]{0}', space=vmem, size = 0x400, scoped, tag = 'input window, operand 4, single buffered']
    #allocation5 [shape = 's32[1]{0}', space=sflag, size = 0x4, scoped, tag = 'scoped memory for decoder2d_forward.1']
    #allocation6 [shape = 'u8[512]{0}', space=vmem, size = 0x400, scoped, tag = 'input window, operand 9, single buffered']
    #allocation7 [shape = 'u8[512]{0}', space=vmem, size = 0x400, scoped, tag = 'input window, operand 10, single buffered']
    #allocation8 [shape = 's32[1]{0}', space=sflag, size = 0x4, scoped, tag = 'scoped memory for decoder2d_forward.1']
    %16 = vsyncpa [#allocation3], 0
    %17 = vsyncpa [#allocation5], 0
    %18 = vsyncpa [#allocation8], 0
    // Predicated region
    $region2: #{decoder2d_forward.1} parent=1 // pred_check
      _
    $region3: #{decoder2d_forward.1} parent=1 // pred_check_branch
      %20 = sbr.rel (0) target = $region5
    $region4: #{decoder2d_forward.1} parent=1 // pred_region
      _
    $region5: #{decoder2d_forward.1} parent=1 // pred_fallthru
      _
    // Predicated region
    $region6: #{decoder2d_forward.1} parent=1 // pred_check
      _
    $region7: #{decoder2d_forward.1} parent=1 // pred_check_branch
      %22 = sbr.rel (0) target = $region9
    $region8: #{decoder2d_forward.1} parent=1 // pred_region
      _
    $region9: #{decoder2d_forward.1} parent=1 // pred_fallthru
      _
    // Predicated region
    $region10: #{decoder2d_forward.1} parent=1 // pred_check
      _
    $region11: #{decoder2d_forward.1} parent=1 // pred_check_branch
      %24 = sbr.rel (0) target = $region13
    $region12: #{decoder2d_forward.1} parent=1 // pred_region
      _
    $region13: #{decoder2d_forward.1} parent=1 // pred_fallthru
      _
    // Predicated region
    $region14: #{decoder2d_forward.1} parent=1 // pred_check
      _
    $region15: #{decoder2d_forward.1} parent=1 // pred_check_branch
      %26 = sbr.rel (0) target = $region17
    $region16: #{decoder2d_forward.1} parent=1 // pred_region
      %28 = vsyncadd [#allocation3], 0
      %s30 = sshll.u32 %s3, 4
      %s31 = int_to_ptr.hbm [resolvable:$true] %s30
      %s32 = sshll.u32 [#allocation2], 4
      %s33 = int_to_ptr.vmem [resolvable:$true] %s32
      %35 = dma.hbm_to_vmem [thread:$0]  %s31, 16, %s33, [#allocation3]
    $region17: #{decoder2d_forward.1} parent=1 // pred_fallthru
      _
    // Predicated region
    $region18: #{decoder2d_forward.1} parent=1 // pred_check
      _
    $region19: #{decoder2d_forward.1} parent=1 // pred_check_branch
      %37 = sbr.rel (0) target = $region21
    $region20: #{decoder2d_forward.1} parent=1 // pred_region
      %39 = vsyncadd [#allocation5], 0
      %s41 = sshll.u32 %s4, 4
      %s42 = int_to_ptr.hbm [resolvable:$true] %s41
      %s43 = sshll.u32 [#allocation4], 4
      %s44 = int_to_ptr.vmem [resolvable:$true] %s43
      %46 = dma.hbm_to_vmem [thread:$0]  %s42, 16, %s44, [#allocation5]
    $region21: #{decoder2d_forward.1} parent=1 // pred_fallthru
      _
    // Predicated region
    $region22: #{decoder2d_forward.1} parent=1 // pred_check
      _
    $region23: #{decoder2d_forward.1} parent=1 // pred_check_branch
      %48 = sbr.rel (0) target = $region25
    $region24: #{decoder2d_forward.1} parent=1 // pred_region
      _
    $region25: #{decoder2d_forward.1} parent=1 // pred_fallthru
      _
    // Predicated region
    $region26: #{decoder2d_forward.1} parent=1 // pred_check
      _
    $region27: #{decoder2d_forward.1} parent=1 // pred_check_branch
      %50 = sbr.rel (0) target = $region29
    $region28: #{decoder2d_forward.1} parent=1 // pred_region
      _
    $region29: #{decoder2d_forward.1} parent=1 // pred_fallthru
      _
    // Predicated region
    $region30: #{decoder2d_forward.1} parent=1 // pred_check
      _
    $region31: #{decoder2d_forward.1} parent=1 // pred_check_branch
      %52 = sbr.rel (0) target = $region33
    $region32: #{decoder2d_forward.1} parent=1 // pred_region
      _
    $region33: #{decoder2d_forward.1} parent=1 // pred_fallthru
      _
    // Predicated region
    $region34: #{decoder2d_forward.1} parent=1 // pred_check
      _
    $region35: #{decoder2d_forward.1} parent=1 // pred_check_branch
      %54 = sbr.rel (0) target = $region37
    $region36: #{decoder2d_forward.1} parent=1 // pred_region
      _
    $region37: #{decoder2d_forward.1} parent=1 // pred_fallthru
      _
    // Predicated region
    $region38: #{decoder2d_forward.1} parent=1 // pred_check
      _
    $region39: #{decoder2d_forward.1} parent=1 // pred_check_branch
      %56 = sbr.rel (0) target = $region41
    $region40: #{decoder2d_forward.1} parent=1 // pred_region
      %58 = vsyncadd [#allocation5], 0
      %s60 = sshll.u32 %s9, 4
      %s61 = int_to_ptr.hbm [resolvable:$true] %s60
      %s62 = sshll.u32 [#allocation6], 4
      %s63 = int_to_ptr.vmem [resolvable:$true] %s62
      %65 = dma.hbm_to_vmem [thread:$0]  %s61, 16, %s63, [#allocation5]
    $region41: #{decoder2d_forward.1} parent=1 // pred_fallthru
      _
    // Predicated region
    $region42: #{decoder2d_forward.1} parent=1 // pred_check
      _
    $region43: #{decoder2d_forward.1} parent=1 // pred_check_branch
      %67 = sbr.rel (0) target = $region45
    $region44: #{decoder2d_forward.1} parent=1 // pred_region
      %69 = vsyncadd [#allocation8], 0
      %s71 = sshll.u32 %s10, 4
      %s72 = int_to_ptr.hbm [resolvable:$true] %s71
      %s73 = sshll.u32 [#allocation7], 4
      %s74 = int_to_ptr.vmem [resolvable:$true] %s73
      %76 = dma.hbm_to_vmem [thread:$0]  %s72, 16, %s74, [#allocation8]
    $region45: #{decoder2d_forward.1} parent=1 // pred_fallthru
      _
    // Predicated region
    $region46: #{decoder2d_forward.1} parent=1 // pred_check
      _
    $region47: #{decoder2d_forward.1} parent=1 // pred_check_branch
      %78 = sbr.rel (0) target = $region49
    $region48: #{decoder2d_forward.1} parent=1 // pred_region
      %80 = dma.done [#allocation3], 16
    $region49: #{decoder2d_forward.1} parent=1 // pred_fallthru
      _
    // Predicated region
    $region50: #{decoder2d_forward.1} parent=1 // pred_check
      _
    $region51: #{decoder2d_forward.1} parent=1 // pred_check_branch
      %82 = sbr.rel (0) target = $region53
    $region52: #{decoder2d_forward.1} parent=1 // pred_region
      %84 = dma.done [#allocation5], 16
    $region53: #{decoder2d_forward.1} parent=1 // pred_fallthru
      _
    // Predicated region
    $region54: #{decoder2d_forward.1} parent=1 // pred_check
      _
    $region55: #{decoder2d_forward.1} parent=1 // pred_check_branch
      %86 = sbr.rel (0) target = $region57
    $region56: #{decoder2d_forward.1} parent=1 // pred_region
      %88 = dma.done [#allocation5], 16
    $region57: #{decoder2d_forward.1} parent=1 // pred_fallthru
      _
    // Predicated region
    $region58: #{decoder2d_forward.1} parent=1 // pred_check
      _
    $region59: #{decoder2d_forward.1} parent=1 // pred_check_branch
      %90 = sbr.rel (0) target = $region61
    $region60: #{decoder2d_forward.1} parent=1 // pred_region
      %92 = dma.done [#allocation8], 16
    $region61: #{decoder2d_forward.1} parent=1 // pred_fallthru
      _
    %v93 = vld [vmem:[%s0] sm:$0xff]
    %v94 = vld [vmem:[%s0 + $0x8] sm:$0xff]
    %v95 = vld [vmem:[%s1] sm:$0xff]
    %v96 = vld [vmem:[%s1 + $0x8] sm:$0xff]
    %v97 = vld [vmem:[%s2] sm:$0xff]
    %v98 = vld [vmem:[%s2 + $0x8] sm:$0xff]
    %v99 = vld [vmem:[#allocation2] sm:$0x1]
    %v100 = vld [vmem:[#allocation4] sm:$0x1]
    %103 = vst [vmem:[#allocation1] ss:$2 sm:$0xff] %v93
    %s104 = scalar_lea.vmem [#allocation1], 16
    %105 = vst [vmem:[%s104] ss:$2 sm:$0xff] %v94
    %v106 = vld.sshfl [vmem:[#allocation1] sm:$0xff pattern:$0x75316420]
    %v107 = vld.sshfl [vmem:[#allocation1 + $0x8] sm:$0xff pattern:$0x75316420]
    %v108 = vld.sshfl [vmem:[#allocation1 + $0x10] sm:$0xff pattern:$0x75316420]
    %v109 = vld.sshfl [vmem:[#allocation1 + $0x18] sm:$0xff pattern:$0x75316420]
    %vm110 = vcmask 31744
    %v112 = vsel %vm110, %v95, 0
    %v115 = vsel %vm110, %v96, 0
    %vm117 = vcmask 1043456
    %v118 = vsel %vm117, %v106, 0
    %v120 = vsel %vm117, %v107, 0
    %v122 = vsel %vm117, %v108, 0
    %v124 = vsel %vm117, %v109, 0
    %126 = vmatpush.msra.mxu0 0.0
    %127 = vmatpush.msra.mxu0 0.0
    %128 = vmatpush.msra.mxu0 0.0
    %129 = vmatpush.msra.mxu0 0.0
    %130 = vmatpush.msra.mxu0 0.0
    %131 = vmatpush.msra.mxu0 0.0
    %132 = vmatpush.msra.mxu0 0.0
    %133 = vmatpush.msra.mxu0 0.0
    %134 = vmatpush.msra.mxu0 0.0
    %135 = vmatpush.msra.mxu0 0.0
    %136 = vmatpush.msra.mxu0 0.0
    %137 = vmatpush.msra.mxu0 0.0
    %138 = vmatpush.msra.mxu0 0.0
    %139 = vmatpush.msra.mxu0 0.0
    %140 = vmatpush.msra.mxu0 0.0
    %141 = vmatpush.msra.mxu0 %v118
    %142 = vmatmul.f32.gmra.mxu0 %v112
    %v143 = vpop.f32.mrf.mxu0
    %v144 = vadd.f32 0.0, %v143
    %145 = vmatmul.f32.gmra.mxu0 %v115
    %v146 = vpop.f32.mrf.mxu0
    %v147 = vadd.f32 0.0, %v146
    %148 = vdwg.mxu0
    %149 = vmatpush.msra.mxu0 0.0
    %150 = vmatpush.msra.mxu0 0.0
    %151 = vmatpush.msra.mxu0 0.0
    %152 = vmatpush.msra.mxu0 0.0
    %153 = vmatpush.msra.mxu0 0.0
    %154 = vmatpush.msra.mxu0 0.0
    %155 = vmatpush.msra.mxu0 0.0
    %156 = vmatpush.msra.mxu0 0.0
    %157 = vmatpush.msra.mxu0 0.0
    %158 = vmatpush.msra.mxu0 0.0
    %159 = vmatpush.msra.mxu0 0.0
    %160 = vmatpush.msra.mxu0 0.0
    %161 = vmatpush.msra.mxu0 0.0
    %162 = vmatpush.msra.mxu0 0.0
    %163 = vmatpush.msra.mxu0 0.0
    %164 = vmatpush.msra.mxu0 %v120
    %165 = vmatmul.f32.gmra.mxu0 %v112
    %v166 = vpop.f32.mrf.mxu0
    %v167 = vadd.f32 0.0, %v166
    %168 = vmatmul.f32.gmra.mxu0 %v115
    %v169 = vpop.f32.mrf.mxu0
    %v170 = vadd.f32 0.0, %v169
    %171 = vdwg.mxu0
    %172 = vmatpush.msra.mxu0 0.0
    %173 = vmatpush.msra.mxu0 0.0
    %174 = vmatpush.msra.mxu0 0.0
    %175 = vmatpush.msra.mxu0 0.0
    %176 = vmatpush.msra.mxu0 0.0
    %177 = vmatpush.msra.mxu0 0.0
    %178 = vmatpush.msra.mxu0 0.0
    %179 = vmatpush.msra.mxu0 0.0
    %180 = vmatpush.msra.mxu0 0.0
    %181 = vmatpush.msra.mxu0 0.0
    %182 = vmatpush.msra.mxu0 0.0
    %183 = vmatpush.msra.mxu0 0.0
    %184 = vmatpush.msra.mxu0 0.0
    %185 = vmatpush.msra.mxu0 0.0
    %186 = vmatpush.msra.mxu0 0.0
    %187 = vmatpush.msra.mxu0 %v122
    %188 = vmatmul.f32.gmra.mxu0 %v112
    %v189 = vpop.f32.mrf.mxu0
    %v190 = vadd.f32 0.0, %v189
    %191 = vmatmul.f32.gmra.mxu0 %v115
    %v192 = vpop.f32.mrf.mxu0
    %v193 = vadd.f32 0.0, %v192
    %194 = vdwg.mxu0
    %195 = vmatpush.msra.mxu0 0.0
    %196 = vmatpush.msra.mxu0 0.0
    %197 = vmatpush.msra.mxu0 0.0
    %198 = vmatpush.msra.mxu0 0.0
    %199 = vmatpush.msra.mxu0 0.0
    %200 = vmatpush.msra.mxu0 0.0
    %201 = vmatpush.msra.mxu0 0.0
    %202 = vmatpush.msra.mxu0 0.0
    %203 = vmatpush.msra.mxu0 0.0
    %204 = vmatpush.msra.mxu0 0.0
    %205 = vmatpush.msra.mxu0 0.0
    %206 = vmatpush.msra.mxu0 0.0
    %207 = vmatpush.msra.mxu0 0.0
    %208 = vmatpush.msra.mxu0 0.0
    %209 = vmatpush.msra.mxu0 0.0
    %210 = vmatpush.msra.mxu0 %v124
    %211 = vmatmul.f32.gmra.mxu0 %v112
    %v212 = vpop.f32.mrf.mxu0
    %v213 = vadd.f32 0.0, %v212
    %214 = vmatmul.f32.gmra.mxu0 %v115
    %v215 = vpop.f32.mrf.mxu0
    %v216 = vadd.f32 0.0, %v215
    %217 = vdwg.mxu0
    %v218 = vadd.f32 %v144, %v167
    %v219 = vadd.f32 %v218, %v190
    %v220 = vadd.f32 %v219, %v213
    %221 = vadd.xlane.f32.xlu0 %v220
    %v222 = vpop.xlane.xlu0 %221
    %v223 = vadd.f32 %v147, %v170
    %v224 = vadd.f32 %v223, %v193
    %v225 = vadd.f32 %v224, %v216
    %226 = vadd.xlane.f32.xlu0 %v225
    %v227 = vpop.xlane.xlu0 %226
    %v228 = vmul.f32 %v144, %v144
    %v229 = vmul.f32 %v167, %v167
    %v230 = vmul.f32 %v190, %v190
    %v231 = vmul.f32 %v213, %v213
    %v232 = vmul.f32 %v147, %v147
    %v233 = vmul.f32 %v170, %v170
    %v234 = vmul.f32 %v193, %v193
    %v235 = vmul.f32 %v216, %v216
    %v236 = vadd.f32 %v228, %v229
    %v237 = vadd.f32 %v236, %v230
    %v238 = vadd.f32 %v237, %v231
    %239 = vadd.xlane.f32.xlu0 %v238
    %v240 = vpop.xlane.xlu0 %239
    %v241 = vadd.f32 %v232, %v233
    %v242 = vadd.f32 %v241, %v234
    %v243 = vadd.f32 %v242, %v235
    %244 = vadd.xlane.f32.xlu0 %v243
    %v245 = vpop.xlane.xlu0 %244
    %v246 = vmul.f32 %v222, %v97
    %v247 = vmul.f32 %v227, %v98
    %v248 = vsel %vm110, %v246, 0.0
    %v249 = vsel %vm110, %v247, 0.0
    %v250 = vadd.f32 %v248, %v249
    %v251 = vrot.slane %v250, 4
    %v252 = vadd.f32 %v250, %v251
    %v253 = vrot.slane %v252, 2
    %v254 = vadd.f32 %v252, %v253
    %v255 = vrot.slane %v254, 1
    %v256 = vadd.f32 %v254, %v255
    %v257 = vmul.f32 %v240, %v97
    %v258 = vmul.f32 %v245, %v98
    %v259 = vsel %vm110, %v257, 0.0
    %v260 = vsel %vm110, %v258, 0.0
    %v261 = vadd.f32 %v259, %v260
    %v262 = vrot.slane %v261, 4
    %v263 = vadd.f32 %v261, %v262
    %v264 = vrot.slane %v263, 2
    %v265 = vadd.f32 %v263, %v264
    %v266 = vrot.slane %v265, 1
    %v267 = vadd.f32 %v265, %v266
    %v268 = vmul.f32 %v256, 0.00048828125
    %v269 = vmul.f32 %v267, 0.00048828125
    %v270 = vmul.f32 %v268, %v268
    %v271 = vsub.f32 %v269, %v270
    %v272 = vadd.f32 %v271, 1e-05
    %v273 = vrsqrt.pop %v272
    %v274 = vmul.f32 %v273, %v272
    %v275 = vmul.f32 %v274, %v273
    %v276 = vmul.f32 0.5, %v275
    %v277 = vsub.f32 1.5, %v276
    %v278 = vmul.f32 %v273, %v277
    %vm279 = vweird.f32 %v272
    %vm280 = vweird.f32 %v273
    %vm281 = vmor %vm279, %vm280
    %v282 = vsel %vm281, %v273, %v278
    %v283 = vmul.f32 %v99, %v282
    %v284 = vmul.f32 %v268, %v283
    %v285 = vsub.f32 %v100, %v284
    %v287 = vperm.slane %v283, 0
    %v289 = vmul.f32 %v97, %v287
    %v290 = vmul.f32 %v98, %v287
    %v291 = vsel %vm110, %v289, 0.0
    %292 = vadd.xlane.f32.xlu0 %v291
    %v293 = vpop.xlane.xlu0 %292
    %v294 = vsel %vm110, %v290, 0.0
    %295 = vadd.xlane.f32.xlu0 %v294
    %v296 = vpop.xlane.xlu0 %295
    %v298 = vperm.slane %v285, 0
    %v300 = vmul.f32 %v97, %v298
    %v301 = vmul.f32 %v98, %v298
    %v302 = vsel %vm110, %v300, 0.0
    %303 = vadd.xlane.f32.xlu0 %v302
    %v304 = vpop.xlane.xlu0 %303
    %v305 = vsel %vm110, %v301, 0.0
    %306 = vadd.xlane.f32.xlu0 %v305
    %v307 = vpop.xlane.xlu0 %306
    %v308 = vmul.f32 %v144, %v293
    %v309 = vmul.f32 %v167, %v293
    %v310 = vmul.f32 %v190, %v293
    %v311 = vmul.f32 %v213, %v293
    %v312 = vmul.f32 %v147, %v296
    %v313 = vmul.f32 %v170, %v296
    %v314 = vmul.f32 %v193, %v296
    %v315 = vmul.f32 %v216, %v296
    %v316 = vadd.f32 %v308, %v304
    %v317 = vadd.f32 %v309, %v304
    %v318 = vadd.f32 %v310, %v304
    %v319 = vadd.f32 %v311, %v304
    %v320 = vadd.f32 %v312, %v307
    %v321 = vadd.f32 %v313, %v307
    %v322 = vadd.f32 %v314, %v307
    %v323 = vadd.f32 %v315, %v307
    %v324 = vmax.f32 %v316, 0.0
    %v325 = vmax.f32 %v317, 0.0
    %v326 = vmax.f32 %v318, 0.0
    %v327 = vmax.f32 %v319, 0.0
    %v328 = vmax.f32 %v320, 0.0
    %v329 = vmax.f32 %v321, 0.0
    %v330 = vmax.f32 %v322, 0.0
    %v331 = vmax.f32 %v323, 0.0
    %v332 = vld [vmem:[%s5] sm:$0xff]
    %v333 = vld [vmem:[%s5 + $0x8] sm:$0xff]
    %v334 = vld [vmem:[%s5 + $0x10] sm:$0xff]
    %v335 = vld [vmem:[%s5 + $0x18] sm:$0xff]
    %v336 = vld [vmem:[%s5 + $0x20] sm:$0xff]
    %v337 = vld [vmem:[%s5 + $0x28] sm:$0xff]
    %v338 = vld [vmem:[%s5 + $0x30] sm:$0xff]
    %v339 = vld [vmem:[%s5 + $0x38] sm:$0xff]
    %v340 = vld [vmem:[%s6] sm:$0xff]
    %v341 = vld [vmem:[%s6 + $0x8] sm:$0xff]
    %v342 = vld [vmem:[%s6 + $0x10] sm:$0xff]
    %v343 = vld [vmem:[%s6 + $0x18] sm:$0xff]
    %v344 = vld [vmem:[%s6 + $0x20] sm:$0xff]
    %v345 = vld [vmem:[%s6 + $0x28] sm:$0xff]
    %v346 = vld [vmem:[%s6 + $0x30] sm:$0xff]
    %v347 = vld [vmem:[%s6 + $0x38] sm:$0xff]
    %v348 = vld [vmem:[%s7] sm:$0xff]
    %v349 = vld [vmem:[%s7 + $0x8] sm:$0xff]
    %v350 = vld [vmem:[%s7 + $0x10] sm:$0xff]
    %v351 = vld [vmem:[%s7 + $0x18] sm:$0xff]
    %v352 = vld [vmem:[%s7 + $0x20] sm:$0xff]
    %v353 = vld [vmem:[%s7 + $0x28] sm:$0xff]
    %v354 = vld [vmem:[%s7 + $0x30] sm:$0xff]
    %v355 = vld [vmem:[%s7 + $0x38] sm:$0xff]
    %v356 = vld [vmem:[%s8] sm:$0xff]
    %v357 = vld [vmem:[%s8 + $0x8] sm:$0xff]
    %v358 = vld [vmem:[%s8 + $0x10] sm:$0xff]
    %v359 = vld [vmem:[%s8 + $0x18] sm:$0xff]
    %v360 = vld [vmem:[%s8 + $0x20] sm:$0xff]
    %v361 = vld [vmem:[%s8 + $0x28] sm:$0xff]
    %v362 = vld [vmem:[%s8 + $0x30] sm:$0xff]
    %v363 = vld [vmem:[%s8 + $0x38] sm:$0xff]
    %v364 = vld [vmem:[#allocation6] sm:$0x1]
    %v365 = vld [vmem:[#allocation7] sm:$0x1]
    %vm366 = vcmask 130048
    %v368 = vsel %vm366, %v348, 0
    %v371 = vsel %vm366, %v349, 0
    %v374 = vsel %vm366, %v350, 0
    %v377 = vsel %vm366, %v351, 0
    %v380 = vsel %vm366, %v352, 0
    %v383 = vsel %vm366, %v353, 0
    %v386 = vsel %vm366, %v354, 0
    %v389 = vsel %vm366, %v355, 0
    %391 = vmatpush.msra.mxu0 0.0
    %392 = vmatpush.msra.mxu0 0.0
    %393 = vmatpush.msra.mxu0 0.0
    %394 = vmatpush.msra.mxu0 0.0
    %395 = vmatpush.msra.mxu0 0.0
    %396 = vmatpush.msra.mxu0 0.0
    %397 = vmatpush.msra.mxu0 0.0
    %398 = vmatpush.msra.mxu0 0.0
    %399 = vmatpush.msra.mxu0 0.0
    %400 = vmatpush.msra.mxu0 0.0
    %401 = vmatpush.msra.mxu0 0.0
    %402 = vmatpush.msra.mxu0 0.0
    %403 = vmatpush.msra.mxu0 0.0
    %404 = vmatpush.msra.mxu0 0.0
    %405 = vmatpush.msra.mxu0 %v336
    %406 = vmatpush.msra.mxu0 %v332
    %407 = vmatmul.f32.gmra.mxu0 %v368
    %v408 = vpop.f32.mrf.mxu0
    %v409 = vadd.f32 0.0, %v408
    %410 = vmatmul.f32.gmra.mxu0 %v371
    %v411 = vpop.f32.mrf.mxu0
    %v412 = vadd.f32 0.0, %v411
    %413 = vmatmul.f32.gmra.mxu0 %v374
    %v414 = vpop.f32.mrf.mxu0
    %v415 = vadd.f32 0.0, %v414
    %416 = vmatmul.f32.gmra.mxu0 %v377
    %v417 = vpop.f32.mrf.mxu0
    %v418 = vadd.f32 0.0, %v417
    %419 = vmatmul.f32.gmra.mxu0 %v380
    %v420 = vpop.f32.mrf.mxu0
    %v421 = vadd.f32 0.0, %v420
    %422 = vmatmul.f32.gmra.mxu0 %v383
    %v423 = vpop.f32.mrf.mxu0
    %v424 = vadd.f32 0.0, %v423
    %425 = vmatmul.f32.gmra.mxu0 %v386
    %v426 = vpop.f32.mrf.mxu0
    %v427 = vadd.f32 0.0, %v426
    %428 = vmatmul.f32.gmra.mxu0 %v389
    %v429 = vpop.f32.mrf.mxu0
    %v430 = vadd.f32 0.0, %v429
    %431 = vdwg.mxu0
    %432 = vmatpush.msra.mxu0 0.0
    %433 = vmatpush.msra.mxu0 0.0
    %434 = vmatpush.msra.mxu0 0.0
    %435 = vmatpush.msra.mxu0 0.0
    %436 = vmatpush.msra.mxu0 0.0
    %437 = vmatpush.msra.mxu0 0.0
    %438 = vmatpush.msra.mxu0 0.0
    %439 = vmatpush.msra.mxu0 0.0
    %440 = vmatpush.msra.mxu0 0.0
    %441 = vmatpush.msra.mxu0 0.0
    %442 = vmatpush.msra.mxu0 0.0
    %443 = vmatpush.msra.mxu0 0.0
    %444 = vmatpush.msra.mxu0 0.0
    %445 = vmatpush.msra.mxu0 0.0
    %446 = vmatpush.msra.mxu0 %v337
    %447 = vmatpush.msra.mxu0 %v333
    %448 = vmatmul.f32.gmra.mxu0 %v368
    %v449 = vpop.f32.mrf.mxu0
    %v450 = vadd.f32 0.0, %v449
    %451 = vmatmul.f32.gmra.mxu0 %v371
    %v452 = vpop.f32.mrf.mxu0
    %v453 = vadd.f32 0.0, %v452
    %454 = vmatmul.f32.gmra.mxu0 %v374
    %v455 = vpop.f32.mrf.mxu0
    %v456 = vadd.f32 0.0, %v455
    %457 = vmatmul.f32.gmra.mxu0 %v377
    %v458 = vpop.f32.mrf.mxu0
    %v459 = vadd.f32 0.0, %v458
    %460 = vmatmul.f32.gmra.mxu0 %v380
    %v461 = vpop.f32.mrf.mxu0
    %v462 = vadd.f32 0.0, %v461
    %463 = vmatmul.f32.gmra.mxu0 %v383
    %v464 = vpop.f32.mrf.mxu0
    %v465 = vadd.f32 0.0, %v464
    %466 = vmatmul.f32.gmra.mxu0 %v386
    %v467 = vpop.f32.mrf.mxu0
    %v468 = vadd.f32 0.0, %v467
    %469 = vmatmul.f32.gmra.mxu0 %v389
    %v470 = vpop.f32.mrf.mxu0
    %v471 = vadd.f32 0.0, %v470
    %472 = vdwg.mxu0
    %473 = vmatpush.msra.mxu0 0.0
    %474 = vmatpush.msra.mxu0 0.0
    %475 = vmatpush.msra.mxu0 0.0
    %476 = vmatpush.msra.mxu0 0.0
    %477 = vmatpush.msra.mxu0 0.0
    %478 = vmatpush.msra.mxu0 0.0
    %479 = vmatpush.msra.mxu0 0.0
    %480 = vmatpush.msra.mxu0 0.0
    %481 = vmatpush.msra.mxu0 0.0
    %482 = vmatpush.msra.mxu0 0.0
    %483 = vmatpush.msra.mxu0 0.0
    %484 = vmatpush.msra.mxu0 0.0
    %485 = vmatpush.msra.mxu0 0.0
    %486 = vmatpush.msra.mxu0 0.0
    %487 = vmatpush.msra.mxu0 %v338
    %488 = vmatpush.msra.mxu0 %v334
    %489 = vmatmul.f32.gmra.mxu0 %v368
    %v490 = vpop.f32.mrf.mxu0
    %v491 = vadd.f32 0.0, %v490
    %492 = vmatmul.f32.gmra.mxu0 %v371
    %v493 = vpop.f32.mrf.mxu0
    %v494 = vadd.f32 0.0, %v493
    %495 = vmatmul.f32.gmra.mxu0 %v374
    %v496 = vpop.f32.mrf.mxu0
    %v497 = vadd.f32 0.0, %v496
    %498 = vmatmul.f32.gmra.mxu0 %v377
    %v499 = vpop.f32.mrf.mxu0
    %v500 = vadd.f32 0.0, %v499
    %501 = vmatmul.f32.gmra.mxu0 %v380
    %v502 = vpop.f32.mrf.mxu0
    %v503 = vadd.f32 0.0, %v502
    %504 = vmatmul.f32.gmra.mxu0 %v383
    %v505 = vpop.f32.mrf.mxu0
    %v506 = vadd.f32 0.0, %v505
    %507 = vmatmul.f32.gmra.mxu0 %v386
    %v508 = vpop.f32.mrf.mxu0
    %v509 = vadd.f32 0.0, %v508
    %510 = vmatmul.f32.gmra.mxu0 %v389
    %v511 = vpop.f32.mrf.mxu0
    %v512 = vadd.f32 0.0, %v511
    %513 = vdwg.mxu0
    %514 = vmatpush.msra.mxu0 0.0
    %515 = vmatpush.msra.mxu0 0.0
    %516 = vmatpush.msra.mxu0 0.0
    %517 = vmatpush.msra.mxu0 0.0
    %518 = vmatpush.msra.mxu0 0.0
    %519 = vmatpush.msra.mxu0 0.0
    %520 = vmatpush.msra.mxu0 0.0
    %521 = vmatpush.msra.mxu0 0.0
    %522 = vmatpush.msra.mxu0 0.0
    %523 = vmatpush.msra.mxu0 0.0
    %524 = vmatpush.msra.mxu0 0.0
    %525 = vmatpush.msra.mxu0 0.0
    %526 = vmatpush.msra.mxu0 0.0
    %527 = vmatpush.msra.mxu0 0.0
    %528 = vmatpush.msra.mxu0 %v339
    %529 = vmatpush.msra.mxu0 %v335
    %530 = vmatmul.f32.gmra.mxu0 %v368
    %v531 = vpop.f32.mrf.mxu0
    %v532 = vadd.f32 0.0, %v531
    %533 = vmatmul.f32.gmra.mxu0 %v371
    %v534 = vpop.f32.mrf.mxu0
    %v535 = vadd.f32 0.0, %v534
    %536 = vmatmul.f32.gmra.mxu0 %v374
    %v537 = vpop.f32.mrf.mxu0
    %v538 = vadd.f32 0.0, %v537
    %539 = vmatmul.f32.gmra.mxu0 %v377
    %v540 = vpop.f32.mrf.mxu0
    %v541 = vadd.f32 0.0, %v540
    %542 = vmatmul.f32.gmra.mxu0 %v380
    %v543 = vpop.f32.mrf.mxu0
    %v544 = vadd.f32 0.0, %v543
    %545 = vmatmul.f32.gmra.mxu0 %v383
    %v546 = vpop.f32.mrf.mxu0
    %v547 = vadd.f32 0.0, %v546
    %548 = vmatmul.f32.gmra.mxu0 %v386
    %v549 = vpop.f32.mrf.mxu0
    %v550 = vadd.f32 0.0, %v549
    %551 = vmatmul.f32.gmra.mxu0 %v389
    %v552 = vpop.f32.mrf.mxu0
    %v553 = vadd.f32 0.0, %v552
    %554 = vdwg.mxu0
    %v556 = vsel %vm366, %v340, 0
    %v559 = vsel %vm366, %v341, 0
    %v562 = vsel %vm366, %v342, 0
    %v565 = vsel %vm366, %v343, 0
    %v568 = vsel %vm366, %v344, 0
    %v571 = vsel %vm366, %v345, 0
    %v574 = vsel %vm366, %v346, 0
    %v577 = vsel %vm366, %v347, 0
    %579 = vmatpush.msra.mxu0 0.0
    %580 = vmatpush.msra.mxu0 0.0
    %581 = vmatpush.msra.mxu0 0.0
    %582 = vmatpush.msra.mxu0 0.0
    %583 = vmatpush.msra.mxu0 0.0
    %584 = vmatpush.msra.mxu0 0.0
    %585 = vmatpush.msra.mxu0 0.0
    %586 = vmatpush.msra.mxu0 0.0
    %587 = vmatpush.msra.mxu0 0.0
    %588 = vmatpush.msra.mxu0 0.0
    %589 = vmatpush.msra.mxu0 0.0
    %590 = vmatpush.msra.mxu0 0.0
    %591 = vmatpush.msra.mxu0 0.0
    %592 = vmatpush.msra.mxu0 0.0
    %593 = vmatpush.msra.mxu0 %v328
    %594 = vmatpush.msra.mxu0 %v324
    %595 = vmatmul.f32.gmra.mxu0 %v556
    %v596 = vpop.f32.mrf.mxu0
    %v597 = vadd.f32 %v409, %v596
    %598 = vmatmul.f32.gmra.mxu0 %v559
    %v599 = vpop.f32.mrf.mxu0
    %v600 = vadd.f32 %v412, %v599
    %601 = vmatmul.f32.gmra.mxu0 %v562
    %v602 = vpop.f32.mrf.mxu0
    %v603 = vadd.f32 %v415, %v602
    %604 = vmatmul.f32.gmra.mxu0 %v565
    %v605 = vpop.f32.mrf.mxu0
    %v606 = vadd.f32 %v418, %v605
    %607 = vmatmul.f32.gmra.mxu0 %v568
    %v608 = vpop.f32.mrf.mxu0
    %v609 = vadd.f32 %v421, %v608
    %610 = vmatmul.f32.gmra.mxu0 %v571
    %v611 = vpop.f32.mrf.mxu0
    %v612 = vadd.f32 %v424, %v611
    %613 = vmatmul.f32.gmra.mxu0 %v574
    %v614 = vpop.f32.mrf.mxu0
    %v615 = vadd.f32 %v427, %v614
    %616 = vmatmul.f32.gmra.mxu0 %v577
    %v617 = vpop.f32.mrf.mxu0
    %v618 = vadd.f32 %v430, %v617
    %619 = vdwg.mxu0
    %620 = vmatpush.msra.mxu0 0.0
    %621 = vmatpush.msra.mxu0 0.0
    %622 = vmatpush.msra.mxu0 0.0
    %623 = vmatpush.msra.mxu0 0.0
    %624 = vmatpush.msra.mxu0 0.0
    %625 = vmatpush.msra.mxu0 0.0
    %626 = vmatpush.msra.mxu0 0.0
    %627 = vmatpush.msra.mxu0 0.0
    %628 = vmatpush.msra.mxu0 0.0
    %629 = vmatpush.msra.mxu0 0.0
    %630 = vmatpush.msra.mxu0 0.0
    %631 = vmatpush.msra.mxu0 0.0
    %632 = vmatpush.msra.mxu0 0.0
    %633 = vmatpush.msra.mxu0 0.0
    %634 = vmatpush.msra.mxu0 %v329
    %635 = vmatpush.msra.mxu0 %v325
    %636 = vmatmul.f32.gmra.mxu0 %v556
    %v637 = vpop.f32.mrf.mxu0
    %v638 = vadd.f32 %v450, %v637
    %639 = vmatmul.f32.gmra.mxu0 %v559
    %v640 = vpop.f32.mrf.mxu0
    %v641 = vadd.f32 %v453, %v640
    %642 = vmatmul.f32.gmra.mxu0 %v562
    %v643 = vpop.f32.mrf.mxu0
    %v644 = vadd.f32 %v456, %v643
    %645 = vmatmul.f32.gmra.mxu0 %v565
    %v646 = vpop.f32.mrf.mxu0
    %v647 = vadd.f32 %v459, %v646
    %648 = vmatmul.f32.gmra.mxu0 %v568
    %v649 = vpop.f32.mrf.mxu0
    %v650 = vadd.f32 %v462, %v649
    %651 = vmatmul.f32.gmra.mxu0 %v571
    %v652 = vpop.f32.mrf.mxu0
    %v653 = vadd.f32 %v465, %v652
    %654 = vmatmul.f32.gmra.mxu0 %v574
    %v655 = vpop.f32.mrf.mxu0
    %v656 = vadd.f32 %v468, %v655
    %657 = vmatmul.f32.gmra.mxu0 %v577
    %v658 = vpop.f32.mrf.mxu0
    %v659 = vadd.f32 %v471, %v658
    %660 = vdwg.mxu0
    %661 = vmatpush.msra.mxu0 0.0
    %662 = vmatpush.msra.mxu0 0.0
    %663 = vmatpush.msra.mxu0 0.0
    %664 = vmatpush.msra.mxu0 0.0
    %665 = vmatpush.msra.mxu0 0.0
    %666 = vmatpush.msra.mxu0 0.0
    %667 = vmatpush.msra.mxu0 0.0
    %668 = vmatpush.msra.mxu0 0.0
    %669 = vmatpush.msra.mxu0 0.0
    %670 = vmatpush.msra.mxu0 0.0
    %671 = vmatpush.msra.mxu0 0.0
    %672 = vmatpush.msra.mxu0 0.0
    %673 = vmatpush.msra.mxu0 0.0
    %674 = vmatpush.msra.mxu0 0.0
    %675 = vmatpush.msra.mxu0 %v330
    %676 = vmatpush.msra.mxu0 %v326
    %677 = vmatmul.f32.gmra.mxu0 %v556
    %v678 = vpop.f32.mrf.mxu0
    %v679 = vadd.f32 %v491, %v678
    %680 = vmatmul.f32.gmra.mxu0 %v559
    %v681 = vpop.f32.mrf.mxu0
    %v682 = vadd.f32 %v494, %v681
    %683 = vmatmul.f32.gmra.mxu0 %v562
    %v684 = vpop.f32.mrf.mxu0
    %v685 = vadd.f32 %v497, %v684
    %686 = vmatmul.f32.gmra.mxu0 %v565
    %v687 = vpop.f32.mrf.mxu0
    %v688 = vadd.f32 %v500, %v687
    %689 = vmatmul.f32.gmra.mxu0 %v568
    %v690 = vpop.f32.mrf.mxu0
    %v691 = vadd.f32 %v503, %v690
    %692 = vmatmul.f32.gmra.mxu0 %v571
    %v693 = vpop.f32.mrf.mxu0
    %v694 = vadd.f32 %v506, %v693
    %695 = vmatmul.f32.gmra.mxu0 %v574
    %v696 = vpop.f32.mrf.mxu0
    %v697 = vadd.f32 %v509, %v696
    %698 = vmatmul.f32.gmra.mxu0 %v577
    %v699 = vpop.f32.mrf.mxu0
    %v700 = vadd.f32 %v512, %v699
    %701 = vdwg.mxu0
    %702 = vmatpush.msra.mxu0 0.0
    %703 = vmatpush.msra.mxu0 0.0
    %704 = vmatpush.msra.mxu0 0.0
    %705 = vmatpush.msra.mxu0 0.0
    %706 = vmatpush.msra.mxu0 0.0
    %707 = vmatpush.msra.mxu0 0.0
    %708 = vmatpush.msra.mxu0 0.0
    %709 = vmatpush.msra.mxu0 0.0
    %710 = vmatpush.msra.mxu0 0.0
    %711 = vmatpush.msra.mxu0 0.0
    %712 = vmatpush.msra.mxu0 0.0
    %713 = vmatpush.msra.mxu0 0.0
    %714 = vmatpush.msra.mxu0 0.0
    %715 = vmatpush.msra.mxu0 0.0
    %716 = vmatpush.msra.mxu0 %v331
    %717 = vmatpush.msra.mxu0 %v327
    %718 = vmatmul.f32.gmra.mxu0 %v556
    %v719 = vpop.f32.mrf.mxu0
    %v720 = vadd.f32 %v532, %v719
    %721 = vmatmul.f32.gmra.mxu0 %v559
    %v722 = vpop.f32.mrf.mxu0
    %v723 = vadd.f32 %v535, %v722
    %724 = vmatmul.f32.gmra.mxu0 %v562
    %v725 = vpop.f32.mrf.mxu0
    %v726 = vadd.f32 %v538, %v725
    %727 = vmatmul.f32.gmra.mxu0 %v565
    %v728 = vpop.f32.mrf.mxu0
    %v729 = vadd.f32 %v541, %v728
    %730 = vmatmul.f32.gmra.mxu0 %v568
    %v731 = vpop.f32.mrf.mxu0
    %v732 = vadd.f32 %v544, %v731
    %733 = vmatmul.f32.gmra.mxu0 %v571
    %v734 = vpop.f32.mrf.mxu0
    %v735 = vadd.f32 %v547, %v734
    %736 = vmatmul.f32.gmra.mxu0 %v574
    %v737 = vpop.f32.mrf.mxu0
    %v738 = vadd.f32 %v550, %v737
    %739 = vmatmul.f32.gmra.mxu0 %v577
    %v740 = vpop.f32.mrf.mxu0
    %v741 = vadd.f32 %v553, %v740
    %742 = vdwg.mxu0
    %v743 = vadd.f32 %v597, %v638
    %v744 = vadd.f32 %v743, %v679
    %v745 = vadd.f32 %v744, %v720
    %746 = vadd.xlane.f32.xlu0 %v745
    %v747 = vpop.xlane.xlu0 %746
    %v748 = vadd.f32 %v600, %v641
    %v749 = vadd.f32 %v748, %v682
    %v750 = vadd.f32 %v749, %v723
    %751 = vadd.xlane.f32.xlu0 %v750
    %v752 = vpop.xlane.xlu0 %751
    %v753 = vadd.f32 %v603, %v644
    %v754 = vadd.f32 %v753, %v685
    %v755 = vadd.f32 %v754, %v726
    %756 = vadd.xlane.f32.xlu0 %v755
    %v757 = vpop.xlane.xlu0 %756
    %v758 = vadd.f32 %v606, %v647
    %v759 = vadd.f32 %v758, %v688
    %v760 = vadd.f32 %v759, %v729
    %761 = vadd.xlane.f32.xlu0 %v760
    %v762 = vpop.xlane.xlu0 %761
    %v763 = vadd.f32 %v609, %v650
    %v764 = vadd.f32 %v763, %v691
    %v765 = vadd.f32 %v764, %v732
    %766 = vadd.xlane.f32.xlu0 %v765
    %v767 = vpop.xlane.xlu0 %766
    %v768 = vadd.f32 %v612, %v653
    %v769 = vadd.f32 %v768, %v694
    %v770 = vadd.f32 %v769, %v735
    %771 = vadd.xlane.f32.xlu0 %v770
    %v772 = vpop.xlane.xlu0 %771
    %v773 = vadd.f32 %v615, %v656
    %v774 = vadd.f32 %v773, %v697
    %v775 = vadd.f32 %v774, %v738
    %776 = vadd.xlane.f32.xlu0 %v775
    %v777 = vpop.xlane.xlu0 %776
    %v778 = vadd.f32 %v618, %v659
    %v779 = vadd.f32 %v778, %v700
    %v780 = vadd.f32 %v779, %v741
    %781 = vadd.xlane.f32.xlu0 %v780
    %v782 = vpop.xlane.xlu0 %781
    %v783 = vmul.f32 %v597, %v597
    %v784 = vmul.f32 %v638, %v638
    %v785 = vmul.f32 %v679, %v679
    %v786 = vmul.f32 %v720, %v720
    %v787 = vmul.f32 %v600, %v600
    %v788 = vmul.f32 %v641, %v641
    %v789 = vmul.f32 %v682, %v682
    %v790 = vmul.f32 %v723, %v723
    %v791 = vmul.f32 %v603, %v603
    %v792 = vmul.f32 %v644, %v644
    %v793 = vmul.f32 %v685, %v685
    %v794 = vmul.f32 %v726, %v726
    %v795 = vmul.f32 %v606, %v606
    %v796 = vmul.f32 %v647, %v647
    %v797 = vmul.f32 %v688, %v688
    %v798 = vmul.f32 %v729, %v729
    %v799 = vmul.f32 %v609, %v609
    %v800 = vmul.f32 %v650, %v650
    %v801 = vmul.f32 %v691, %v691
    %v802 = vmul.f32 %v732, %v732
    %v803 = vmul.f32 %v612, %v612
    %v804 = vmul.f32 %v653, %v653
    %v805 = vmul.f32 %v694, %v694
    %v806 = vmul.f32 %v735, %v735
    %v807 = vmul.f32 %v615, %v615
    %v808 = vmul.f32 %v656, %v656
    %v809 = vmul.f32 %v697, %v697
    %v810 = vmul.f32 %v738, %v738
    %v811 = vmul.f32 %v618, %v618
    %v812 = vmul.f32 %v659, %v659
    %v813 = vmul.f32 %v700, %v700
    %v814 = vmul.f32 %v741, %v741
    %v815 = vadd.f32 %v783, %v784
    %v816 = vadd.f32 %v815, %v785
    %v817 = vadd.f32 %v816, %v786
    %818 = vadd.xlane.f32.xlu0 %v817
    %v819 = vpop.xlane.xlu0 %818
    %v820 = vadd.f32 %v787, %v788
    %v821 = vadd.f32 %v820, %v789
    %v822 = vadd.f32 %v821, %v790
    %823 = vadd.xlane.f32.xlu0 %v822
    %v824 = vpop.xlane.xlu0 %823
    %v825 = vadd.f32 %v791, %v792
    %v826 = vadd.f32 %v825, %v793
    %v827 = vadd.f32 %v826, %v794
    %828 = vadd.xlane.f32.xlu0 %v827
    %v829 = vpop.xlane.xlu0 %828
    %v830 = vadd.f32 %v795, %v796
    %v831 = vadd.f32 %v830, %v797
    %v832 = vadd.f32 %v831, %v798
    %833 = vadd.xlane.f32.xlu0 %v832
    %v834 = vpop.xlane.xlu0 %833
    %v835 = vadd.f32 %v799, %v800
    %v836 = vadd.f32 %v835, %v801
    %v837 = vadd.f32 %v836, %v802
    %838 = vadd.xlane.f32.xlu0 %v837
    %v839 = vpop.xlane.xlu0 %838
    %v840 = vadd.f32 %v803, %v804
    %v841 = vadd.f32 %v840, %v805
    %v842 = vadd.f32 %v841, %v806
    %843 = vadd.xlane.f32.xlu0 %v842
    %v844 = vpop.xlane.xlu0 %843
    %v845 = vadd.f32 %v807, %v808
    %v846 = vadd.f32 %v845, %v809
    %v847 = vadd.f32 %v846, %v810
    %848 = vadd.xlane.f32.xlu0 %v847
    %v849 = vpop.xlane.xlu0 %848
    %v850 = vadd.f32 %v811, %v812
    %v851 = vadd.f32 %v850, %v813
    %v852 = vadd.f32 %v851, %v814
    %853 = vadd.xlane.f32.xlu0 %v852
    %v854 = vpop.xlane.xlu0 %853
    %v855 = vmul.f32 %v747, %v356
    %v856 = vmul.f32 %v752, %v357
    %v857 = vmul.f32 %v757, %v358
    %v858 = vmul.f32 %v762, %v359
    %v859 = vmul.f32 %v767, %v360
    %v860 = vmul.f32 %v772, %v361
    %v861 = vmul.f32 %v777, %v362
    %v862 = vmul.f32 %v782, %v363
    %v863 = vsel %vm110, %v855, 0.0
    %v864 = vsel %vm110, %v856, 0.0
    %v865 = vadd.f32 %v863, %v864
    %v866 = vsel %vm110, %v857, 0.0
    %v867 = vadd.f32 %v865, %v866
    %v868 = vsel %vm110, %v858, 0.0
    %v869 = vadd.f32 %v867, %v868
    %v870 = vsel %vm110, %v859, 0.0
    %v871 = vadd.f32 %v869, %v870
    %v872 = vsel %vm110, %v860, 0.0
    %v873 = vadd.f32 %v871, %v872
    %v874 = vsel %vm110, %v861, 0.0
    %v875 = vadd.f32 %v873, %v874
    %v876 = vsel %vm110, %v862, 0.0
    %v877 = vadd.f32 %v875, %v876
    %v878 = vrot.slane %v877, 4
    %v879 = vadd.f32 %v877, %v878
    %v880 = vrot.slane %v879, 2
    %v881 = vadd.f32 %v879, %v880
    %v882 = vrot.slane %v881, 1
    %v883 = vadd.f32 %v881, %v882
    %v884 = vmul.f32 %v819, %v356
    %v885 = vmul.f32 %v824, %v357
    %v886 = vmul.f32 %v829, %v358
    %v887 = vmul.f32 %v834, %v359
    %v888 = vmul.f32 %v839, %v360
    %v889 = vmul.f32 %v844, %v361
    %v890 = vmul.f32 %v849, %v362
    %v891 = vmul.f32 %v854, %v363
    %v892 = vsel %vm110, %v884, 0.0
    %v893 = vsel %vm110, %v885, 0.0
    %v894 = vadd.f32 %v892, %v893
    %v895 = vsel %vm110, %v886, 0.0
    %v896 = vadd.f32 %v894, %v895
    %v897 = vsel %vm110, %v887, 0.0
    %v898 = vadd.f32 %v896, %v897
    %v899 = vsel %vm110, %v888, 0.0
    %v900 = vadd.f32 %v898, %v899
    %v901 = vsel %vm110, %v889, 0.0
    %v902 = vadd.f32 %v900, %v901
    %v903 = vsel %vm110, %v890, 0.0
    %v904 = vadd.f32 %v902, %v903
    %v905 = vsel %vm110, %v891, 0.0
    %v906 = vadd.f32 %v904, %v905
    %v907 = vrot.slane %v906, 4
    %v908 = vadd.f32 %v906, %v907
    %v909 = vrot.slane %v908, 2
    %v910 = vadd.f32 %v908, %v909
    %v911 = vrot.slane %v910, 1
    %v912 = vadd.f32 %v910, %v911
    %v913 = vmul.f32 %v883, 0.00012207031
    %v914 = vmul.f32 %v912, 0.00012207031
    %v915 = vmul.f32 %v913, %v913
    %v916 = vsub.f32 %v914, %v915
    %v917 = vadd.f32 %v916, 1e-05
    %v918 = vrsqrt.pop %v917
    %v919 = vmul.f32 %v918, %v917
    %v920 = vmul.f32 %v919, %v918
    %v921 = vmul.f32 0.5, %v920
    %v922 = vsub.f32 1.5, %v921
    %v923 = vmul.f32 %v918, %v922
    %vm924 = vweird.f32 %v917
    %vm925 = vweird.f32 %v918
    %vm926 = vmor %vm924, %vm925
    %v927 = vsel %vm926, %v918, %v923
    %v928 = vmul.f32 %v364, %v927
    %v929 = vmul.f32 %v913, %v928
    %v930 = vsub.f32 %v365, %v929
    %v932 = vperm.slane %v928, 0
    %v934 = vmul.f32 %v356, %v932
    %v935 = vmul.f32 %v357, %v932
    %v936 = vmul.f32 %v358, %v932
    %v937 = vmul.f32 %v359, %v932
    %v938 = vmul.f32 %v360, %v932
    %v939 = vmul.f32 %v361, %v932
    %v940 = vmul.f32 %v362, %v932
    %v941 = vmul.f32 %v363, %v932
    %v942 = vsel %vm110, %v934, 0.0
    %943 = vadd.xlane.f32.xlu0 %v942
    %v944 = vpop.xlane.xlu0 %943
    %v945 = vsel %vm110, %v935, 0.0
    %946 = vadd.xlane.f32.xlu0 %v945
    %v947 = vpop.xlane.xlu0 %946
    %v948 = vsel %vm110, %v936, 0.0
    %949 = vadd.xlane.f32.xlu0 %v948
    %v950 = vpop.xlane.xlu0 %949
    %v951 = vsel %vm110, %v937, 0.0
    %952 = vadd.xlane.f32.xlu0 %v951
    %v953 = vpop.xlane.xlu0 %952
    %v954 = vsel %vm110, %v938, 0.0
    %955 = vadd.xlane.f32.xlu0 %v954
    %v956 = vpop.xlane.xlu0 %955
    %v957 = vsel %vm110, %v939, 0.0
    %958 = vadd.xlane.f32.xlu0 %v957
    %v959 = vpop.xlane.xlu0 %958
    %v960 = vsel %vm110, %v940, 0.0
    %961 = vadd.xlane.f32.xlu0 %v960
    %v962 = vpop.xlane.xlu0 %961
    %v963 = vsel %vm110, %v941, 0.0
    %964 = vadd.xlane.f32.xlu0 %v963
    %v965 = vpop.xlane.xlu0 %964
    %v967 = vperm.slane %v930, 0
    %v969 = vmul.f32 %v356, %v967
    %v970 = vmul.f32 %v357, %v967
    %v971 = vmul.f32 %v358, %v967
    %v972 = vmul.f32 %v359, %v967
    %v973 = vmul.f32 %v360, %v967
    %v974 = vmul.f32 %v361, %v967
    %v975 = vmul.f32 %v362, %v967
    %v976 = vmul.f32 %v363, %v967
    %v977 = vsel %vm110, %v969, 0.0
    %978 = vadd.xlane.f32.xlu0 %v977
    %v979 = vpop.xlane.xlu0 %978
    %v980 = vsel %vm110, %v970, 0.0
    %981 = vadd.xlane.f32.xlu0 %v980
    %v982 = vpop.xlane.xlu0 %981
    %v983 = vsel %vm110, %v971, 0.0
    %984 = vadd.xlane.f32.xlu0 %v983
    %v985 = vpop.xlane.xlu0 %984
    %v986 = vsel %vm110, %v972, 0.0
    %987 = vadd.xlane.f32.xlu0 %v986
    %v988 = vpop.xlane.xlu0 %987
    %v989 = vsel %vm110, %v973, 0.0
    %990 = vadd.xlane.f32.xlu0 %v989
    %v991 = vpop.xlane.xlu0 %990
    %v992 = vsel %vm110, %v974, 0.0
    %993 = vadd.xlane.f32.xlu0 %v992
    %v994 = vpop.xlane.xlu0 %993
    %v995 = vsel %vm110, %v975, 0.0
    %996 = vadd.xlane.f32.xlu0 %v995
    %v997 = vpop.xlane.xlu0 %996
    %v998 = vsel %vm110, %v976, 0.0
    %999 = vadd.xlane.f32.xlu0 %v998
    %v1000 = vpop.xlane.xlu0 %999
    %v1001 = vmul.f32 %v597, %v944
    %v1002 = vmul.f32 %v638, %v944
    %v1003 = vmul.f32 %v679, %v944
    %v1004 = vmul.f32 %v720, %v944
    %v1005 = vmul.f32 %v600, %v947
    %v1006 = vmul.f32 %v641, %v947
    %v1007 = vmul.f32 %v682, %v947
    %v1008 = vmul.f32 %v723, %v947
    %v1009 = vmul.f32 %v603, %v950
    %v1010 = vmul.f32 %v644, %v950
    %v1011 = vmul.f32 %v685, %v950
    %v1012 = vmul.f32 %v726, %v950
    %v1013 = vmul.f32 %v606, %v953
    %v1014 = vmul.f32 %v647, %v953
    %v1015 = vmul.f32 %v688, %v953
    %v1016 = vmul.f32 %v729, %v953
    %v1017 = vmul.f32 %v609, %v956
    %v1018 = vmul.f32 %v650, %v956
    %v1019 = vmul.f32 %v691, %v956
    %v1020 = vmul.f32 %v732, %v956
    %v1021 = vmul.f32 %v612, %v959
    %v1022 = vmul.f32 %v653, %v959
    %v1023 = vmul.f32 %v694, %v959
    %v1024 = vmul.f32 %v735, %v959
    %v1025 = vmul.f32 %v615, %v962
    %v1026 = vmul.f32 %v656, %v962
    %v1027 = vmul.f32 %v697, %v962
    %v1028 = vmul.f32 %v738, %v962
    %v1029 = vmul.f32 %v618, %v965
    %v1030 = vmul.f32 %v659, %v965
    %v1031 = vmul.f32 %v700, %v965
    %v1032 = vmul.f32 %v741, %v965
    %v1033 = vadd.f32 %v1001, %v979
    %v1034 = vadd.f32 %v1002, %v979
    %v1035 = vadd.f32 %v1003, %v979
    %v1036 = vadd.f32 %v1004, %v979
    %v1037 = vadd.f32 %v1005, %v982
    %v1038 = vadd.f32 %v1006, %v982
    %v1039 = vadd.f32 %v1007, %v982
    %v1040 = vadd.f32 %v1008, %v982
    %v1041 = vadd.f32 %v1009, %v985
    %v1042 = vadd.f32 %v1010, %v985
    %v1043 = vadd.f32 %v1011, %v985
    %v1044 = vadd.f32 %v1012, %v985
    %v1045 = vadd.f32 %v1013, %v988
    %v1046 = vadd.f32 %v1014, %v988
    %v1047 = vadd.f32 %v1015, %v988
    %v1048 = vadd.f32 %v1016, %v988
    %v1049 = vadd.f32 %v1017, %v991
    %v1050 = vadd.f32 %v1018, %v991
    %v1051 = vadd.f32 %v1019, %v991
    %v1052 = vadd.f32 %v1020, %v991
    %v1053 = vadd.f32 %v1021, %v994
    %v1054 = vadd.f32 %v1022, %v994
    %v1055 = vadd.f32 %v1023, %v994
    %v1056 = vadd.f32 %v1024, %v994
    %v1057 = vadd.f32 %v1025, %v997
    %v1058 = vadd.f32 %v1026, %v997
    %v1059 = vadd.f32 %v1027, %v997
    %v1060 = vadd.f32 %v1028, %v997
    %v1061 = vadd.f32 %v1029, %v1000
    %v1062 = vadd.f32 %v1030, %v1000
    %v1063 = vadd.f32 %v1031, %v1000
    %v1064 = vadd.f32 %v1032, %v1000
    %v1065 = vmax.f32 %v1033, 0.0
    %v1066 = vmax.f32 %v1034, 0.0
    %v1067 = vmax.f32 %v1035, 0.0
    %v1068 = vmax.f32 %v1036, 0.0
    %v1069 = vmax.f32 %v1037, 0.0
    %v1070 = vmax.f32 %v1038, 0.0
    %v1071 = vmax.f32 %v1039, 0.0
    %v1072 = vmax.f32 %v1040, 0.0
    %v1073 = vmax.f32 %v1041, 0.0
    %v1074 = vmax.f32 %v1042, 0.0
    %v1075 = vmax.f32 %v1043, 0.0
    %v1076 = vmax.f32 %v1044, 0.0
    %v1077 = vmax.f32 %v1045, 0.0
    %v1078 = vmax.f32 %v1046, 0.0
    %v1079 = vmax.f32 %v1047, 0.0
    %v1080 = vmax.f32 %v1048, 0.0
    %v1081 = vmax.f32 %v1049, 0.0
    %v1082 = vmax.f32 %v1050, 0.0
    %v1083 = vmax.f32 %v1051, 0.0
    %v1084 = vmax.f32 %v1052, 0.0
    %v1085 = vmax.f32 %v1053, 0.0
    %v1086 = vmax.f32 %v1054, 0.0
    %v1087 = vmax.f32 %v1055, 0.0
    %v1088 = vmax.f32 %v1056, 0.0
    %v1089 = vmax.f32 %v1057, 0.0
    %v1090 = vmax.f32 %v1058, 0.0
    %v1091 = vmax.f32 %v1059, 0.0
    %v1092 = vmax.f32 %v1060, 0.0
    %v1093 = vmax.f32 %v1061, 0.0
    %v1094 = vmax.f32 %v1062, 0.0
    %v1095 = vmax.f32 %v1063, 0.0
    %v1096 = vmax.f32 %v1064, 0.0
    %1097 = vst [vmem:[%s11] sm:$0xff] %v1065
    %1098 = vst [vmem:[%s11 + $0x8] sm:$0xff] %v1066
    %1099 = vst [vmem:[%s11 + $0x10] sm:$0xff] %v1067
    %1100 = vst [vmem:[%s11 + $0x18] sm:$0xff] %v1068
    %1101 = vst [vmem:[%s11 + $0x20] sm:$0xff] %v1069
    %1102 = vst [vmem:[%s11 + $0x28] sm:$0xff] %v1070
    %1103 = vst [vmem:[%s11 + $0x30] sm:$0xff] %v1071
    %1104 = vst [vmem:[%s11 + $0x38] sm:$0xff] %v1072
    %1105 = vst [vmem:[%s11 + $0x40] sm:$0xff] %v1073
    %1106 = vst [vmem:[%s11 + $0x48] sm:$0xff] %v1074
    %1107 = vst [vmem:[%s11 + $0x50] sm:$0xff] %v1075
    %1108 = vst [vmem:[%s11 + $0x58] sm:$0xff] %v1076
    %1109 = vst [vmem:[%s11 + $0x60] sm:$0xff] %v1077
    %1110 = vst [vmem:[%s11 + $0x68] sm:$0xff] %v1078
    %1111 = vst [vmem:[%s11 + $0x70] sm:$0xff] %v1079
    %1112 = vst [vmem:[%s11 + $0x78] sm:$0xff] %v1080
    %1113 = vst [vmem:[%s11 + $0x80] sm:$0xff] %v1081
    %1114 = vst [vmem:[%s11 + $0x88] sm:$0xff] %v1082
    %1115 = vst [vmem:[%s11 + $0x90] sm:$0xff] %v1083
    %1116 = vst [vmem:[%s11 + $0x98] sm:$0xff] %v1084
    %1117 = vst [vmem:[%s11 + $0xa0] sm:$0xff] %v1085
    %1118 = vst [vmem:[%s11 + $0xa8] sm:$0xff] %v1086
    %1119 = vst [vmem:[%s11 + $0xb0] sm:$0xff] %v1087
    %1120 = vst [vmem:[%s11 + $0xb8] sm:$0xff] %v1088
    %1121 = vst [vmem:[%s11 + $0xc0] sm:$0xff] %v1089
    %1122 = vst [vmem:[%s11 + $0xc8] sm:$0xff] %v1090
    %1123 = vst [vmem:[%s11 + $0xd0] sm:$0xff] %v1091
    %1124 = vst [vmem:[%s11 + $0xd8] sm:$0xff] %v1092
    %1125 = vst [vmem:[%s11 + $0xe0] sm:$0xff] %v1093
    %1126 = vst [vmem:[%s11 + $0xe8] sm:$0xff] %v1094
    %1127 = vst [vmem:[%s11 + $0xf0] sm:$0xff] %v1095
    %1128 = vst [vmem:[%s11 + $0xf8] sm:$0xff] %v1096
    // Predicated region
    $region62: #{decoder2d_forward.1} parent=1 // pred_check
      _
    $region63: #{decoder2d_forward.1} parent=1 // pred_check_branch
      %1130 = sbr.rel (0) target = $region65
    $region64: #{decoder2d_forward.1} parent=1 // pred_region
      _
    $region65: #{decoder2d_forward.1} parent=1 // pred_fallthru
      _
    // Predicated region
    $region66: #{decoder2d_forward.1} parent=1 // pred_check
      _
    $region67: #{decoder2d_forward.1} parent=1 // pred_check_branch
      %1132 = sbr.rel (0) target = $region69
    $region68: #{decoder2d_forward.1} parent=1 // pred_region
      _
    $region69: #{decoder2d_forward.1} parent=1 // pred_fallthru
      _
    %1133 = vsyncpa [#allocation3], 1
    %1134 = vsyncpa [#allocation5], 1
    %1135 = vsyncpa [#allocation8], 1

</llo_original>
